<compile_context>
chip_gen: v7x
topology: tpu7x:2x2x1
jax: 0.10.0
libtpu: 0.0.40
codegen_flags: <defaults>
</compile_context>

<pallas_src>
import jax
import jax.numpy as jnp
from jax.experimental import pallas as pl
from jax.experimental.pallas import tpu as pltpu

D_IN, D_H, D_OUT = 784, 128, 10
D_IN_PAD = 896     # 7 * 128, lane-aligned contraction dim for layer 1
D_OUT_PAD = 128    # lane-dense output (unmasked vst), sliced to 10 in the wrapper


def _round_up(x, m):
    return ((x + m - 1) // m) * m


def mlp_kernel(x_ref, w1_ref, w2_ref, w3_ref, o_ref):
    # layer1 + relu (bf16 operands, f32 accumulate)
    h1 = jnp.dot(x_ref[...], w1_ref[...], preferred_element_type=jnp.float32)
    h1 = jnp.maximum(h1, 0.0)
    # layer2 + relu
    h2 = jnp.dot(h1.astype(jnp.bfloat16), w2_ref[...],
                 preferred_element_type=jnp.float32)
    h2 = jnp.maximum(h2, 0.0)
    # layer3 (logits, no activation) -> lane-dense padded output
    o_ref[...] = jnp.dot(h2.astype(jnp.bfloat16), w3_ref[...],
                         preferred_element_type=jnp.float32).astype(o_ref.dtype)


def network_a_forward(x, w1, w2, w3, *, max_tile=256):
    """Forward pass of NetworkA.

    x : (B, 784) float32
    w1: (128, 784), w2: (128, 128), w3: (10, 128)  -- PyTorch nn.Linear layout
    returns (B, 10) float32 logits.
    """
    B = x.shape[0]
    # Batch tile: multiple of 16 (bf16 sublane packing), capped for vreg pressure.
    TB = min(max_tile, _round_up(B, 16))
    B_pad = _round_up(B, TB)

    # Pad + cast operands (zero padding is exact for matmul).
    xp = jnp.zeros((B_pad, D_IN_PAD), jnp.bfloat16)
    xp = xp.at[:B, :D_IN].set(x.astype(jnp.bfloat16))
    w1p = jnp.zeros((D_IN_PAD, D_H), jnp.bfloat16)
    w1p = w1p.at[:D_IN, :].set(w1.T.astype(jnp.bfloat16))
    w2p = w2.T.astype(jnp.bfloat16)
    w3p = jnp.zeros((D_H, D_OUT_PAD), jnp.bfloat16)
    w3p = w3p.at[:, :D_OUT].set(w3.T.astype(jnp.bfloat16))

    flops = 2 * B_pad * (D_IN_PAD * D_H + D_H * D_H + D_H * D_OUT_PAD)
    bytes_accessed = (xp.size + w1p.size + w2p.size + w3p.size) * 2 \
        + B_pad * D_OUT_PAD * 4

    out = pl.pallas_call(
        mlp_kernel,
        out_shape=jax.ShapeDtypeStruct((B_pad, D_OUT_PAD), jnp.float32),
        grid_spec=pltpu.PrefetchScalarGridSpec(
            num_scalar_prefetch=0,
            grid=(B_pad // TB,),
            in_specs=[
                pl.BlockSpec((TB, D_IN_PAD), lambda i: (i, 0)),
                pl.BlockSpec((D_IN_PAD, D_H), lambda i: (0, 0)),   # resident
                pl.BlockSpec((D_H, D_H), lambda i: (0, 0)),        # resident
                pl.BlockSpec((D_H, D_OUT_PAD), lambda i: (0, 0)),  # resident
            ],
            out_specs=pl.BlockSpec((TB, D_OUT_PAD), lambda i: (i, 0)),
        ),
        compiler_params=pltpu.CompilerParams(
            dimension_semantics=("parallel",),   # batch tiles independent (v7x 2 TCs)
            vmem_limit_bytes=32 * 1024 * 1024,
        ),
        cost_estimate=pl.CostEstimate(
            flops=flops, transcendentals=0, bytes_accessed=bytes_accessed),
    )(xp, w1p, w2p, w3p)

    return out[:B, :D_OUT]


def init_params(key):
    """Deterministic init mimicking nn.Linear(bias=False): weight (out, in)."""
    k1, k2, k3 = jax.random.split(key, 3)

    def u(k, shape, fan_in):
        b = 1.0 / jnp.sqrt(fan_in)
        return jax.random.uniform(k, shape, jnp.float32, -b, b)

    w1 = u(k1, (D_H, D_IN), D_IN)    # layer1.weight
    w2 = u(k2, (D_H, D_H), D_H)      # layer2.weight
    w3 = u(k3, (D_OUT, D_H), D_H)    # layer3.weight
    return w1, w2, w3


if __name__ == "__main__":
    key = jax.random.PRNGKey(0)
    kx, kw = jax.random.split(key)
    B = 8
    x = jax.random.normal(kx, (B, D_IN), jnp.float32)
    w1, w2, w3 = init_params(kw)

    out = network_a_forward(x, w1, w2, w3)
    out = jax.block_until_ready(out)

    # pure-JAX f32 reference (same math as the PyTorch forward, bias=False)
    ref = jnp.maximum(x @ w1.T, 0.0)
    ref = jnp.maximum(ref @ w2.T, 0.0)
    ref = ref @ w3.T

    assert out.shape == (B, D_OUT)
    # bf16 operands (f32 accumulation) vs f32 reference -> loosened tolerance.
    assert jnp.allclose(out, ref, atol=2e-2, rtol=2e-2), "mismatch vs reference"
    print("KERNEL_OK")
</pallas_src>

<mosaic_0001>
module attributes {stable_mosaic.version = 11 : i64} {
  func.func @mlp_kernel(%arg0: i32, %arg1: memref<16x896xbf16, #tpu.memory_space<vmem>>, %arg2: memref<896x128xbf16, #tpu.memory_space<vmem>>, %arg3: memref<128x128xbf16, #tpu.memory_space<vmem>>, %arg4: memref<128x128xbf16, #tpu.memory_space<vmem>>, %arg5: memref<16x128xf32, #tpu.memory_space<vmem>>) attributes {dimension_semantics = [#tpu.dimension_semantics<parallel>], iteration_bounds = array<i64: 1>, scalar_prefetch = 0 : i64, scratch_operands = 0 : i64, tpu.core_type = #tpu.core_type<tc>, window_params = [{transform_indices = @transform_0, window_bounds = array<i64: 16, 896>}, {pipeline_mode = #tpu.pipeline_mode<synchronous>, transform_indices = @transform_1, window_bounds = array<i64: 896, 128>}, {pipeline_mode = #tpu.pipeline_mode<synchronous>, transform_indices = @transform_2, window_bounds = array<i64: 128, 128>}, {pipeline_mode = #tpu.pipeline_mode<synchronous>, transform_indices = @transform_3, window_bounds = array<i64: 128, 128>}, {transform_indices = @transform_4, window_bounds = array<i64: 16, 128>}]} {
    %c0 = arith.constant 0 : index
    %c0_0 = arith.constant 0 : index
    %0 = vector.load %arg1[%c0, %c0_0] : memref<16x896xbf16, #tpu.memory_space<vmem>>, vector<16x896xbf16>
    %c0_1 = arith.constant 0 : index
    %c0_2 = arith.constant 0 : index
    %1 = vector.load %arg2[%c0_1, %c0_2] : memref<896x128xbf16, #tpu.memory_space<vmem>>, vector<896x128xbf16>
    %cst = arith.constant dense<0.000000e+00> : vector<16x128xf32>
    %2 = tpu.matmul %0, %1, %cst {dimension_numbers = #tpu.dot_dimension_numbers<[1], [0], [0], [1], [0, 0, 1, 1], [], []>} : vector<16x896xbf16>, vector<896x128xbf16>, vector<16x128xf32> -> vector<16x128xf32>
    %cst_3 = arith.constant 0.000000e+00 : f32
    %3 = vector.broadcast %cst_3 : f32 to vector<16x128xf32>
    %4 = arith.maximumf %2, %3 : vector<16x128xf32>
    %5 = arith.truncf %4 : vector<16x128xf32> to vector<16x128xbf16>
    %c0_4 = arith.constant 0 : index
    %c0_5 = arith.constant 0 : index
    %6 = vector.load %arg3[%c0_4, %c0_5] : memref<128x128xbf16, #tpu.memory_space<vmem>>, vector<128x128xbf16>
    %cst_6 = arith.constant dense<0.000000e+00> : vector<16x128xf32>
    %7 = tpu.matmul %5, %6, %cst_6 {dimension_numbers = #tpu.dot_dimension_numbers<[1], [0], [0], [1], [0, 0, 1, 1], [], []>} : vector<16x128xbf16>, vector<128x128xbf16>, vector<16x128xf32> -> vector<16x128xf32>
    %cst_7 = arith.constant 0.000000e+00 : f32
    %8 = vector.broadcast %cst_7 : f32 to vector<16x128xf32>
    %9 = arith.maximumf %7, %8 : vector<16x128xf32>
    %10 = arith.truncf %9 : vector<16x128xf32> to vector<16x128xbf16>
    %c0_8 = arith.constant 0 : index
    %c0_9 = arith.constant 0 : index
    %11 = vector.load %arg4[%c0_8, %c0_9] : memref<128x128xbf16, #tpu.memory_space<vmem>>, vector<128x128xbf16>
    %cst_10 = arith.constant dense<0.000000e+00> : vector<16x128xf32>
    %12 = tpu.matmul %10, %11, %cst_10 {dimension_numbers = #tpu.dot_dimension_numbers<[1], [0], [0], [1], [0, 0, 1, 1], [], []>} : vector<16x128xbf16>, vector<128x128xbf16>, vector<16x128xf32> -> vector<16x128xf32>
    %c0_11 = arith.constant 0 : index
    %c0_12 = arith.constant 0 : index
    %13 = vector.load %arg5[%c0_11, %c0_12] : memref<16x128xf32, #tpu.memory_space<vmem>>, vector<16x128xf32>
    tpu.vector_store %arg5[%c0_11, %c0_12], %12 {strides = array<i32>} : memref<16x128xf32, #tpu.memory_space<vmem>>, vector<16x128xf32>,
    return
  }
  func.func @transform_0(%arg0: i32) -> (i32, i32) {
    %c0_i32 = arith.constant 0 : i32
    %c0_i32_0 = arith.constant 0 : i32
    return %arg0, %c0_i32 : i32, i32
  }
  func.func @transform_1(%arg0: i32) -> (i32, i32) {
    %c0_i32 = arith.constant 0 : i32
    %c0_i32_0 = arith.constant 0 : i32
    %c0_i32_1 = arith.constant 0 : i32
    return %c0_i32, %c0_i32_0 : i32, i32
  }
  func.func @transform_2(%arg0: i32) -> (i32, i32) {
    %c0_i32 = arith.constant 0 : i32
    %c0_i32_0 = arith.constant 0 : i32
    %c0_i32_1 = arith.constant 0 : i32
    return %c0_i32, %c0_i32_0 : i32, i32
  }
  func.func @transform_3(%arg0: i32) -> (i32, i32) {
    %c0_i32 = arith.constant 0 : i32
    %c0_i32_0 = arith.constant 0 : i32
    %c0_i32_1 = arith.constant 0 : i32
    return %c0_i32, %c0_i32_0 : i32, i32
  }
  func.func @transform_4(%arg0: i32) -> (i32, i32) {
    %c0_i32 = arith.constant 0 : i32
    %c0_i32_0 = arith.constant 0 : i32
    return %arg0, %c0_i32 : i32, i32
  }
}

</mosaic_0001>

<llo_original>
// kernel: tpu_custom_call.1
$region0: #{tpu_custom_call.1}
  #allocation0 [shape = 'u32[]', space=smem, size = 0x4, offset = 0x4, fixed_abs, tag = 'smem constant byte address 0x4 - core index']
  #allocation1 [shape = 'u32[144,128]{1,0:T(1,128)}', space=vmem, size = 0x12000, scoped, tag = 'internal scratch']
  %s0 = inlined_call_operand.hbm [shape: bf16[16,896], index: 0, kind: input, shape index: {}]
  %s1 = inlined_call_operand.hbm [shape: bf16[896,128], index: 1, kind: input, shape index: {}]
  %s2 = inlined_call_operand.hbm [shape: bf16[128,128], index: 2, kind: input, shape index: {}]
  %s3 = inlined_call_operand.hbm [shape: bf16[128,128], index: 3, kind: input, shape index: {}]
  %s4 = inlined_call_operand.hbm [shape: f32[16,128], index: 4, kind: output, shape index: {}]
  %s5 = sld [smem:[#allocation0]]
  $region42: #{tpu_custom_call.1} parent=0
    _
  %s7 = ssub.s32 1, %s5
  %s8 = scalar_select 0, %s7, %s5
  $region1: #{tpu_custom_call.1} parent=0
    #allocation2 [shape = 'u8[28672]{0}', space=vmem, size = 0x7000, scoped, tag = 'input window, operand 0, single buffered']
    #allocation3 [shape = 's32[1]{0}', space=sflag, size = 0x4, scoped, tag = 'scoped memory for tpu_custom_call.1']
    #allocation4 [shape = 's32[1]{0}', space=sflag, size = 0x4, scoped, tag = 'scoped memory for tpu_custom_call.1']
    #allocation5 [shape = 'u8[229376]{0}', space=vmem, size = 0x38000, scoped, tag = 'input window, operand 1, single buffered']
    #allocation6 [shape = 's32[1]{0}', space=sflag, size = 0x4, scoped, tag = 'scoped memory for tpu_custom_call.1']
    #allocation7 [shape = 'u8[32768]{0}', space=vmem, size = 0x8000, scoped, tag = 'input window, operand 2, single buffered']
    #allocation8 [shape = 'u8[32768]{0}', space=vmem, size = 0x8000, scoped, tag = 'input window, operand 3, single buffered']
    #allocation9 [shape = 's32[1]{0}', space=sflag, size = 0x4, scoped, tag = 'scoped memory for tpu_custom_call.1']
    #allocation10 [shape = 'u8[8192]{0}', space=vmem, size = 0x2000, scoped, tag = 'output window, operand 0, single buffered']
    %9 = vsyncpa [#allocation3], 0
    %10 = vsyncpa [#allocation6], 0
    %11 = vsyncpa [#allocation9], 0
    %12 = vsyncpa [#allocation4], 0
    // Predicated region
    $region2: #{tpu_custom_call.1} parent=1 // pred_check
      _
    $region3: #{tpu_custom_call.1} parent=1 // pred_check_branch
      %14 = sbr.rel (0) target = $region5
    $region4: #{tpu_custom_call.1} parent=1 // pred_region
      %s16 = ssub.s32 896, 896
      %17 = vsyncadd [#allocation3], %s16
      %s18 = sshll.u32 [#allocation2], 4
      %s19 = int_to_ptr.vmem [resolvable:$true] %s18
      %24 = dma.hbm_to_vmem [thread:$0]  %s0, 896, %s19, [#allocation3], 448, 448, 28
    $region5: #{tpu_custom_call.1} parent=1 // pred_fallthru
      _
    // Predicated region
    $region6: #{tpu_custom_call.1} parent=1 // pred_check
      _
    $region7: #{tpu_custom_call.1} parent=1 // pred_check_branch
      %26 = sbr.rel (0) target = $region9
    $region8: #{tpu_custom_call.1} parent=1 // pred_region
      %s28 = ssub.s32 7168, 7168
      %29 = vsyncadd [#allocation6], %s28
      %s30 = sshll.u32 [#allocation5], 4
      %s31 = int_to_ptr.vmem [resolvable:$true] %s30
      %36 = dma.hbm_to_vmem [thread:$0]  %s1, 7168, %s31, [#allocation6], 64, 64, 4
    $region9: #{tpu_custom_call.1} parent=1 // pred_fallthru
      _
    // Predicated region
    $region10: #{tpu_custom_call.1} parent=1 // pred_check
      _
    $region11: #{tpu_custom_call.1} parent=1 // pred_check_branch
      %38 = sbr.rel (0) target = $region13
    $region12: #{tpu_custom_call.1} parent=1 // pred_region
      %s40 = ssub.s32 1024, 1024
      %41 = vsyncadd [#allocation6], %s40
      %s42 = sshll.u32 [#allocation7], 4
      %s43 = int_to_ptr.vmem [resolvable:$true] %s42
      %48 = dma.hbm_to_vmem [thread:$0]  %s2, 1024, %s43, [#allocation6], 64, 64, 4
    $region13: #{tpu_custom_call.1} parent=1 // pred_fallthru
      _
    // Predicated region
    $region14: #{tpu_custom_call.1} parent=1 // pred_check
      _
    $region15: #{tpu_custom_call.1} parent=1 // pred_check_branch
      %50 = sbr.rel (0) target = $region17
    $region16: #{tpu_custom_call.1} parent=1 // pred_region
      %s52 = ssub.s32 1024, 1024
      %53 = vsyncadd [#allocation9], %s52
      %s54 = sshll.u32 [#allocation8], 4
      %s55 = int_to_ptr.vmem [resolvable:$true] %s54
      %60 = dma.hbm_to_vmem [thread:$0]  %s3, 1024, %s55, [#allocation9], 64, 64, 4
    $region17: #{tpu_custom_call.1} parent=1 // pred_fallthru
      _
    // Predicated region
    $region18: #{tpu_custom_call.1} parent=1 // pred_check
      _
    $region19: #{tpu_custom_call.1} parent=1 // pred_check_branch
      %62 = sbr.rel (0) target = $region21
    $region20: #{tpu_custom_call.1} parent=1 // pred_region
      %63 = dma.done [#allocation3], 896
    $region21: #{tpu_custom_call.1} parent=1 // pred_fallthru
      _
    // Predicated region
    $region22: #{tpu_custom_call.1} parent=1 // pred_check
      _
    $region23: #{tpu_custom_call.1} parent=1 // pred_check_branch
      %65 = sbr.rel (0) target = $region25
    $region24: #{tpu_custom_call.1} parent=1 // pred_region
      %66 = dma.done [#allocation6], 7168
    $region25: #{tpu_custom_call.1} parent=1 // pred_fallthru
      _
    // Predicated region
    $region26: #{tpu_custom_call.1} parent=1 // pred_check
      _
    $region27: #{tpu_custom_call.1} parent=1 // pred_check_branch
      %68 = sbr.rel (0) target = $region29
    $region28: #{tpu_custom_call.1} parent=1 // pred_region
      %69 = dma.done [#allocation6], 1024
    $region29: #{tpu_custom_call.1} parent=1 // pred_fallthru
      _
    // Predicated region
    $region30: #{tpu_custom_call.1} parent=1 // pred_check
      _
    $region31: #{tpu_custom_call.1} parent=1 // pred_check_branch
      %71 = sbr.rel (0) target = $region33
    $region32: #{tpu_custom_call.1} parent=1 // pred_region
      %72 = dma.done [#allocation9], 1024
    $region33: #{tpu_custom_call.1} parent=1 // pred_fallthru
      _
    %v74 = vld [vmem:[#allocation2] sm:$0xff]
    %v75 = vld [vmem:[#allocation2 + $0x8] sm:$0xff]
    %v76 = vld [vmem:[#allocation2 + $0x10] sm:$0xff]
    %v77 = vld [vmem:[#allocation2 + $0x18] sm:$0xf]
    %v78 = vld [vmem:[#allocation2 + $0x1c] sm:$0xff]
    %v79 = vld [vmem:[#allocation2 + $0x24] sm:$0xff]
    %v80 = vld [vmem:[#allocation2 + $0x2c] sm:$0xff]
    %v81 = vld [vmem:[#allocation2 + $0x34] sm:$0xf]
    %v82 = vld [vmem:[#allocation5] sm:$0xf]
    %v83 = vld [vmem:[#allocation5 + $0x4] sm:$0xf]
    %v84 = vld [vmem:[#allocation5 + $0x8] sm:$0xf]
    %v85 = vld [vmem:[#allocation5 + $0xc] sm:$0xf]
    %v86 = vld [vmem:[#allocation5 + $0x10] sm:$0xf]
    %v87 = vld [vmem:[#allocation5 + $0x14] sm:$0xf]
    %v88 = vld [vmem:[#allocation5 + $0x18] sm:$0xf]
    %v89 = vld [vmem:[#allocation5 + $0x1c] sm:$0xf]
    %v90 = vld [vmem:[#allocation5 + $0x20] sm:$0xf]
    %v91 = vld [vmem:[#allocation5 + $0x24] sm:$0xf]
    %v92 = vld [vmem:[#allocation5 + $0x28] sm:$0xf]
    %v93 = vld [vmem:[#allocation5 + $0x2c] sm:$0xf]
    %v94 = vld [vmem:[#allocation5 + $0x30] sm:$0xf]
    %v95 = vld [vmem:[#allocation5 + $0x34] sm:$0xf]
    %v96 = vld [vmem:[#allocation5 + $0x38] sm:$0xf]
    %v97 = vld [vmem:[#allocation5 + $0x3c] sm:$0xf]
    %v98 = vld [vmem:[#allocation5 + $0x40] sm:$0xf]
    %v99 = vld [vmem:[#allocation5 + $0x44] sm:$0xf]
    %v100 = vld [vmem:[#allocation5 + $0x48] sm:$0xf]
    %v101 = vld [vmem:[#allocation5 + $0x4c] sm:$0xf]
    %v102 = vld [vmem:[#allocation5 + $0x50] sm:$0xf]
    %v103 = vld [vmem:[#allocation5 + $0x54] sm:$0xf]
    %v104 = vld [vmem:[#allocation5 + $0x58] sm:$0xf]
    %v105 = vld [vmem:[#allocation5 + $0x5c] sm:$0xf]
    %v106 = vld [vmem:[#allocation5 + $0x60] sm:$0xf]
    %v107 = vld [vmem:[#allocation5 + $0x64] sm:$0xf]
    %v108 = vld [vmem:[#allocation5 + $0x68] sm:$0xf]
    %v109 = vld [vmem:[#allocation5 + $0x6c] sm:$0xf]
    %v110 = vld [vmem:[#allocation5 + $0x70] sm:$0xf]
    %v111 = vld [vmem:[#allocation5 + $0x74] sm:$0xf]
    %v112 = vld [vmem:[#allocation5 + $0x78] sm:$0xf]
    %v113 = vld [vmem:[#allocation5 + $0x7c] sm:$0xf]
    %v114 = vld [vmem:[#allocation5 + $0x80] sm:$0xf]
    %v115 = vld [vmem:[#allocation5 + $0x84] sm:$0xf]
    %v116 = vld [vmem:[#allocation5 + $0x88] sm:$0xf]
    %v117 = vld [vmem:[#allocation5 + $0x8c] sm:$0xf]
    %v118 = vld [vmem:[#allocation5 + $0x90] sm:$0xf]
    %v119 = vld [vmem:[#allocation5 + $0x94] sm:$0xf]
    %v120 = vld [vmem:[#allocation5 + $0x98] sm:$0xf]
    %v121 = vld [vmem:[#allocation5 + $0x9c] sm:$0xf]
    %v122 = vld [vmem:[#allocation5 + $0xa0] sm:$0xf]
    %v123 = vld [vmem:[#allocation5 + $0xa4] sm:$0xf]
    %v124 = vld [vmem:[#allocation5 + $0xa8] sm:$0xf]
    %v125 = vld [vmem:[#allocation5 + $0xac] sm:$0xf]
    %v126 = vld [vmem:[#allocation5 + $0xb0] sm:$0xf]
    %v127 = vld [vmem:[#allocation5 + $0xb4] sm:$0xf]
    %v128 = vld [vmem:[#allocation5 + $0xb8] sm:$0xf]
    %v129 = vld [vmem:[#allocation5 + $0xbc] sm:$0xf]
    %v130 = vld [vmem:[#allocation5 + $0xc0] sm:$0xf]
    %v131 = vld [vmem:[#allocation5 + $0xc4] sm:$0xf]
    %v132 = vld [vmem:[#allocation5 + $0xc8] sm:$0xf]
    %v133 = vld [vmem:[#allocation5 + $0xcc] sm:$0xf]
    %v134 = vld [vmem:[#allocation5 + $0xd0] sm:$0xf]
    %v135 = vld [vmem:[#allocation5 + $0xd4] sm:$0xf]
    %v136 = vld [vmem:[#allocation5 + $0xd8] sm:$0xf]
    %v137 = vld [vmem:[#allocation5 + $0xdc] sm:$0xf]
    %v138 = vld [vmem:[#allocation5 + $0xe0] sm:$0xf]
    %v139 = vld [vmem:[#allocation5 + $0xe4] sm:$0xf]
    %v140 = vld [vmem:[#allocation5 + $0xe8] sm:$0xf]
    %v141 = vld [vmem:[#allocation5 + $0xec] sm:$0xf]
    %v142 = vld [vmem:[#allocation5 + $0xf0] sm:$0xf]
    %v143 = vld [vmem:[#allocation5 + $0xf4] sm:$0xf]
    %v144 = vld [vmem:[#allocation5 + $0xf8] sm:$0xf]
    %v145 = vld [vmem:[#allocation5 + $0xfc] sm:$0xf]
    %v146 = vld [vmem:[#allocation5 + $0x100] sm:$0xf]
    %v147 = vld [vmem:[#allocation5 + $0x104] sm:$0xf]
    %v148 = vld [vmem:[#allocation5 + $0x108] sm:$0xf]
    %v149 = vld [vmem:[#allocation5 + $0x10c] sm:$0xf]
    %v150 = vld [vmem:[#allocation5 + $0x110] sm:$0xf]
    %v151 = vld [vmem:[#allocation5 + $0x114] sm:$0xf]
    %v152 = vld [vmem:[#allocation5 + $0x118] sm:$0xf]
    %v153 = vld [vmem:[#allocation5 + $0x11c] sm:$0xf]
    %v154 = vld [vmem:[#allocation5 + $0x120] sm:$0xf]
    %v155 = vld [vmem:[#allocation5 + $0x124] sm:$0xf]
    %v156 = vld [vmem:[#allocation5 + $0x128] sm:$0xf]
    %v157 = vld [vmem:[#allocation5 + $0x12c] sm:$0xf]
    %v158 = vld [vmem:[#allocation5 + $0x130] sm:$0xf]
    %v159 = vld [vmem:[#allocation5 + $0x134] sm:$0xf]
    %v160 = vld [vmem:[#allocation5 + $0x138] sm:$0xf]
    %v161 = vld [vmem:[#allocation5 + $0x13c] sm:$0xf]
    %v162 = vld [vmem:[#allocation5 + $0x140] sm:$0xf]
    %v163 = vld [vmem:[#allocation5 + $0x144] sm:$0xf]
    %v164 = vld [vmem:[#allocation5 + $0x148] sm:$0xf]
    %v165 = vld [vmem:[#allocation5 + $0x14c] sm:$0xf]
    %v166 = vld [vmem:[#allocation5 + $0x150] sm:$0xf]
    %v167 = vld [vmem:[#allocation5 + $0x154] sm:$0xf]
    %v168 = vld [vmem:[#allocation5 + $0x158] sm:$0xf]
    %v169 = vld [vmem:[#allocation5 + $0x15c] sm:$0xf]
    %v170 = vld [vmem:[#allocation5 + $0x160] sm:$0xf]
    %v171 = vld [vmem:[#allocation5 + $0x164] sm:$0xf]
    %v172 = vld [vmem:[#allocation5 + $0x168] sm:$0xf]
    %v173 = vld [vmem:[#allocation5 + $0x16c] sm:$0xf]
    %v174 = vld [vmem:[#allocation5 + $0x170] sm:$0xf]
    %v175 = vld [vmem:[#allocation5 + $0x174] sm:$0xf]
    %v176 = vld [vmem:[#allocation5 + $0x178] sm:$0xf]
    %v177 = vld [vmem:[#allocation5 + $0x17c] sm:$0xf]
    %v178 = vld [vmem:[#allocation5 + $0x180] sm:$0xf]
    %v179 = vld [vmem:[#allocation5 + $0x184] sm:$0xf]
    %v180 = vld [vmem:[#allocation5 + $0x188] sm:$0xf]
    %v181 = vld [vmem:[#allocation5 + $0x18c] sm:$0xf]
    %v182 = vld [vmem:[#allocation5 + $0x190] sm:$0xf]
    %v183 = vld [vmem:[#allocation5 + $0x194] sm:$0xf]
    %v184 = vld [vmem:[#allocation5 + $0x198] sm:$0xf]
    %v185 = vld [vmem:[#allocation5 + $0x19c] sm:$0xf]
    %v186 = vld [vmem:[#allocation5 + $0x1a0] sm:$0xf]
    %v187 = vld [vmem:[#allocation5 + $0x1a4] sm:$0xf]
    %v188 = vld [vmem:[#allocation5 + $0x1a8] sm:$0xf]
    %v189 = vld [vmem:[#allocation5 + $0x1ac] sm:$0xf]
    %v190 = vld [vmem:[#allocation5 + $0x1b0] sm:$0xf]
    %v191 = vld [vmem:[#allocation5 + $0x1b4] sm:$0xf]
    %v192 = vld [vmem:[#allocation5 + $0x1b8] sm:$0xf]
    %v193 = vld [vmem:[#allocation5 + $0x1bc] sm:$0xf]
    %v202 = vunpack.c.l.b16 %v74
    %v203 = vunpack.c.h.b16 %v74
    %v204 = vunpack.c.l.b16 %v75
    %v205 = vunpack.c.h.b16 %v75
    %v206 = vunpack.c.l.b16 %v76
    %v207 = vunpack.c.h.b16 %v76
    %v208 = vunpack.c.l.b16 %v77
    %v209 = vunpack.c.l.b16 %v78
    %v210 = vunpack.c.h.b16 %v78
    %v211 = vunpack.c.l.b16 %v79
    %v212 = vunpack.c.h.b16 %v79
    %v213 = vunpack.c.l.b16 %v80
    %v214 = vunpack.c.h.b16 %v80
    %v215 = vunpack.c.l.b16 %v81
    %v216 = vpack.c.b16 %v209, %v202
    %v217 = vpack.c.b16 %v210, %v203
    %v218 = vpack.c.b16 %v211, %v204
    %v219 = vpack.c.b16 %v212, %v205
    %v220 = vpack.c.b16 %v213, %v206
    %v221 = vpack.c.b16 %v214, %v207
    %v222 = vpack.c.b16 %v215, %v208
    %v342 = vunpack.c.l.b16 %v82
    %v343 = vunpack.c.l.b16 %v83
    %v344 = vunpack.c.l.b16 %v84
    %v345 = vunpack.c.l.b16 %v85
    %v346 = vunpack.c.l.b16 %v86
    %v347 = vunpack.c.l.b16 %v87
    %v348 = vunpack.c.l.b16 %v88
    %v349 = vunpack.c.l.b16 %v89
    %v350 = vunpack.c.l.b16 %v90
    %v351 = vunpack.c.l.b16 %v91
    %v352 = vunpack.c.l.b16 %v92
    %v353 = vunpack.c.l.b16 %v93
    %v354 = vunpack.c.l.b16 %v94
    %v355 = vunpack.c.l.b16 %v95
    %v356 = vunpack.c.l.b16 %v96
    %v357 = vunpack.c.l.b16 %v97
    %v358 = vunpack.c.l.b16 %v98
    %v359 = vunpack.c.l.b16 %v99
    %v360 = vunpack.c.l.b16 %v100
    %v361 = vunpack.c.l.b16 %v101
    %v362 = vunpack.c.l.b16 %v102
    %v363 = vunpack.c.l.b16 %v103
    %v364 = vunpack.c.l.b16 %v104
    %v365 = vunpack.c.l.b16 %v105
    %v366 = vunpack.c.l.b16 %v106
    %v367 = vunpack.c.l.b16 %v107
    %v368 = vunpack.c.l.b16 %v108
    %v369 = vunpack.c.l.b16 %v109
    %v370 = vunpack.c.l.b16 %v110
    %v371 = vunpack.c.l.b16 %v111
    %v372 = vunpack.c.l.b16 %v112
    %v373 = vunpack.c.l.b16 %v113
    %v374 = vunpack.c.l.b16 %v114
    %v375 = vunpack.c.l.b16 %v115
    %v376 = vunpack.c.l.b16 %v116
    %v377 = vunpack.c.l.b16 %v117
    %v378 = vunpack.c.l.b16 %v118
    %v379 = vunpack.c.l.b16 %v119
    %v380 = vunpack.c.l.b16 %v120
    %v381 = vunpack.c.l.b16 %v121
    %v382 = vunpack.c.l.b16 %v122
    %v383 = vunpack.c.l.b16 %v123
    %v384 = vunpack.c.l.b16 %v124
    %v385 = vunpack.c.l.b16 %v125
    %v386 = vunpack.c.l.b16 %v126
    %v387 = vunpack.c.l.b16 %v127
    %v388 = vunpack.c.l.b16 %v128
    %v389 = vunpack.c.l.b16 %v129
    %v390 = vunpack.c.l.b16 %v130
    %v391 = vunpack.c.l.b16 %v131
    %v392 = vunpack.c.l.b16 %v132
    %v393 = vunpack.c.l.b16 %v133
    %v394 = vunpack.c.l.b16 %v134
    %v395 = vunpack.c.l.b16 %v135
    %v396 = vunpack.c.l.b16 %v136
    %v397 = vunpack.c.l.b16 %v137
    %v398 = vunpack.c.l.b16 %v138
    %v399 = vunpack.c.l.b16 %v139
    %v400 = vunpack.c.l.b16 %v140
    %v401 = vunpack.c.l.b16 %v141
    %v402 = vunpack.c.l.b16 %v142
    %v403 = vunpack.c.l.b16 %v143
    %v404 = vunpack.c.l.b16 %v144
    %v405 = vunpack.c.l.b16 %v145
    %v406 = vunpack.c.l.b16 %v146
    %v407 = vunpack.c.l.b16 %v147
    %v408 = vunpack.c.l.b16 %v148
    %v409 = vunpack.c.l.b16 %v149
    %v410 = vunpack.c.l.b16 %v150
    %v411 = vunpack.c.l.b16 %v151
    %v412 = vunpack.c.l.b16 %v152
    %v413 = vunpack.c.l.b16 %v153
    %v414 = vunpack.c.l.b16 %v154
    %v415 = vunpack.c.l.b16 %v155
    %v416 = vunpack.c.l.b16 %v156
    %v417 = vunpack.c.l.b16 %v157
    %v418 = vunpack.c.l.b16 %v158
    %v419 = vunpack.c.l.b16 %v159
    %v420 = vunpack.c.l.b16 %v160
    %v421 = vunpack.c.l.b16 %v161
    %v422 = vunpack.c.l.b16 %v162
    %v423 = vunpack.c.l.b16 %v163
    %v424 = vunpack.c.l.b16 %v164
    %v425 = vunpack.c.l.b16 %v165
    %v426 = vunpack.c.l.b16 %v166
    %v427 = vunpack.c.l.b16 %v167
    %v428 = vunpack.c.l.b16 %v168
    %v429 = vunpack.c.l.b16 %v169
    %v430 = vunpack.c.l.b16 %v170
    %v431 = vunpack.c.l.b16 %v171
    %v432 = vunpack.c.l.b16 %v172
    %v433 = vunpack.c.l.b16 %v173
    %v434 = vunpack.c.l.b16 %v174
    %v435 = vunpack.c.l.b16 %v175
    %v436 = vunpack.c.l.b16 %v176
    %v437 = vunpack.c.l.b16 %v177
    %v438 = vunpack.c.l.b16 %v178
    %v439 = vunpack.c.l.b16 %v179
    %v440 = vunpack.c.l.b16 %v180
    %v441 = vunpack.c.l.b16 %v181
    %v442 = vunpack.c.l.b16 %v182
    %v443 = vunpack.c.l.b16 %v183
    %v444 = vunpack.c.l.b16 %v184
    %v445 = vunpack.c.l.b16 %v185
    %v446 = vunpack.c.l.b16 %v186
    %v447 = vunpack.c.l.b16 %v187
    %v448 = vunpack.c.l.b16 %v188
    %v449 = vunpack.c.l.b16 %v189
    %v450 = vunpack.c.l.b16 %v190
    %v451 = vunpack.c.l.b16 %v191
    %v452 = vunpack.c.l.b16 %v192
    %v453 = vunpack.c.l.b16 %v193
    %v454 = vpack.c.b16 %v343, %v342
    %v455 = vpack.c.b16 %v345, %v344
    %v456 = vpack.c.b16 %v347, %v346
    %v457 = vpack.c.b16 %v349, %v348
    %v458 = vpack.c.b16 %v351, %v350
    %v459 = vpack.c.b16 %v353, %v352
    %v460 = vpack.c.b16 %v355, %v354
    %v461 = vpack.c.b16 %v357, %v356
    %v462 = vpack.c.b16 %v359, %v358
    %v463 = vpack.c.b16 %v361, %v360
    %v464 = vpack.c.b16 %v363, %v362
    %v465 = vpack.c.b16 %v365, %v364
    %v466 = vpack.c.b16 %v367, %v366
    %v467 = vpack.c.b16 %v369, %v368
    %v468 = vpack.c.b16 %v371, %v370
    %v469 = vpack.c.b16 %v373, %v372
    %v470 = vpack.c.b16 %v375, %v374
    %v471 = vpack.c.b16 %v377, %v376
    %v472 = vpack.c.b16 %v379, %v378
    %v473 = vpack.c.b16 %v381, %v380
    %v474 = vpack.c.b16 %v383, %v382
    %v475 = vpack.c.b16 %v385, %v384
    %v476 = vpack.c.b16 %v387, %v386
    %v477 = vpack.c.b16 %v389, %v388
    %v478 = vpack.c.b16 %v391, %v390
    %v479 = vpack.c.b16 %v393, %v392
    %v480 = vpack.c.b16 %v395, %v394
    %v481 = vpack.c.b16 %v397, %v396
    %v482 = vpack.c.b16 %v399, %v398
    %v483 = vpack.c.b16 %v401, %v400
    %v484 = vpack.c.b16 %v403, %v402
    %v485 = vpack.c.b16 %v405, %v404
    %v486 = vpack.c.b16 %v407, %v406
    %v487 = vpack.c.b16 %v409, %v408
    %v488 = vpack.c.b16 %v411, %v410
    %v489 = vpack.c.b16 %v413, %v412
    %v490 = vpack.c.b16 %v415, %v414
    %v491 = vpack.c.b16 %v417, %v416
    %v492 = vpack.c.b16 %v419, %v418
    %v493 = vpack.c.b16 %v421, %v420
    %v494 = vpack.c.b16 %v423, %v422
    %v495 = vpack.c.b16 %v425, %v424
    %v496 = vpack.c.b16 %v427, %v426
    %v497 = vpack.c.b16 %v429, %v428
    %v498 = vpack.c.b16 %v431, %v430
    %v499 = vpack.c.b16 %v433, %v432
    %v500 = vpack.c.b16 %v435, %v434
    %v501 = vpack.c.b16 %v437, %v436
    %v502 = vpack.c.b16 %v439, %v438
    %v503 = vpack.c.b16 %v441, %v440
    %v504 = vpack.c.b16 %v443, %v442
    %v505 = vpack.c.b16 %v445, %v444
    %v506 = vpack.c.b16 %v447, %v446
    %v507 = vpack.c.b16 %v449, %v448
    %v508 = vpack.c.b16 %v451, %v450
    %v509 = vpack.c.b16 %v453, %v452
    %566 = vmatprep.subr.bf16.mxu0 0
    %567 = vmatpush1.bf16.msra.mxu0 %v454
    %568 = vmatprep.subr.bf16.mxu0 0
    %569 = vmatpush1.bf16.msra.mxu0 %v455
    %570 = vmatprep.subr.bf16.mxu0 0
    %571 = vmatpush1.bf16.msra.mxu0 %v456
    %572 = vmatprep.subr.bf16.mxu0 0
    %573 = vmatpush1.bf16.msra.mxu0 %v457
    %574 = vmatprep.subr.bf16.mxu0 0
    %575 = vmatpush1.bf16.msra.mxu0 %v458
    %576 = vmatprep.subr.bf16.mxu0 0
    %577 = vmatpush1.bf16.msra.mxu0 %v459
    %578 = vmatprep.subr.bf16.mxu0 0
    %579 = vmatpush1.bf16.msra.mxu0 %v460
    %580 = vmatprep.subr.bf16.mxu0 0
    %581 = vmatpush1.bf16.msra.mxu0 %v461
    %582 = vmatprep.subr.bf16.mxu0 0
    %583 = vmatpush1.bf16.msra.mxu0 %v462
    %584 = vmatprep.subr.bf16.mxu0 0
    %585 = vmatpush1.bf16.msra.mxu0 %v463
    %586 = vmatprep.subr.bf16.mxu0 0
    %587 = vmatpush1.bf16.msra.mxu0 %v464
    %588 = vmatprep.subr.bf16.mxu0 0
    %589 = vmatpush1.bf16.msra.mxu0 %v465
    %590 = vmatprep.subr.bf16.mxu0 0
    %591 = vmatpush1.bf16.msra.mxu0 %v466
    %592 = vmatprep.subr.bf16.mxu0 0
    %593 = vmatpush1.bf16.msra.mxu0 %v467
    %594 = vmatprep.subr.bf16.mxu0 0
    %595 = vmatpush1.bf16.msra.mxu0 %v468
    %596 = vmatprep.subr.bf16.mxu0 0
    %597 = vmatpush1.bf16.msra.mxu0 %v469
    %598 = vmatprep.mubr.bf16.mxu0 %v217
    %599 = vmatmul.mubr.bf16.gmra.mrb[0].mxu0 %v216
    %v600 = vpop.f32.mrb[0].mxu0
    %v601 = vadd.f32 0.0, %v600
    %v602 = vpop.f32.mrb[0].mxu0
    %v603 = vpop.f32.mrb[0].mxu0
    %v604 = vadd.f32 0.0, %v603
    %v605 = vpop.f32.mrb[0].mxu0
    %606 = vdwg.mxu0
    %607 = vmatprep.subr.bf16.mxu0 0
    %608 = vmatpush1.bf16.msra.mxu0 %v470
    %609 = vmatprep.subr.bf16.mxu0 0
    %610 = vmatpush1.bf16.msra.mxu0 %v471
    %611 = vmatprep.subr.bf16.mxu0 0
    %612 = vmatpush1.bf16.msra.mxu0 %v472
    %613 = vmatprep.subr.bf16.mxu0 0
    %614 = vmatpush1.bf16.msra.mxu0 %v473
    %615 = vmatprep.subr.bf16.mxu0 0
    %616 = vmatpush1.bf16.msra.mxu0 %v474
    %617 = vmatprep.subr.bf16.mxu0 0
    %618 = vmatpush1.bf16.msra.mxu0 %v475
    %619 = vmatprep.subr.bf16.mxu0 0
    %620 = vmatpush1.bf16.msra.mxu0 %v476
    %621 = vmatprep.subr.bf16.mxu0 0
    %622 = vmatpush1.bf16.msra.mxu0 %v477
    %623 = vmatprep.subr.bf16.mxu0 0
    %624 = vmatpush1.bf16.msra.mxu0 %v478
    %625 = vmatprep.subr.bf16.mxu0 0
    %626 = vmatpush1.bf16.msra.mxu0 %v479
    %627 = vmatprep.subr.bf16.mxu0 0
    %628 = vmatpush1.bf16.msra.mxu0 %v480
    %629 = vmatprep.subr.bf16.mxu0 0
    %630 = vmatpush1.bf16.msra.mxu0 %v481
    %631 = vmatprep.subr.bf16.mxu0 0
    %632 = vmatpush1.bf16.msra.mxu0 %v482
    %633 = vmatprep.subr.bf16.mxu0 0
    %634 = vmatpush1.bf16.msra.mxu0 %v483
    %635 = vmatprep.subr.bf16.mxu0 0
    %636 = vmatpush1.bf16.msra.mxu0 %v484
    %637 = vmatprep.subr.bf16.mxu0 0
    %638 = vmatpush1.bf16.msra.mxu0 %v485
    %639 = vmatprep.mubr.bf16.mxu0 %v219
    %640 = vmatmul.mubr.bf16.gmra.mrb[0].mxu0 %v218
    %v641 = vpop.f32.mrb[0].mxu0
    %v642 = vadd.f32 %v601, %v641
    %v643 = vpop.f32.mrb[0].mxu0
    %v644 = vpop.f32.mrb[0].mxu0
    %v645 = vadd.f32 %v604, %v644
    %v646 = vpop.f32.mrb[0].mxu0
    %647 = vdwg.mxu0
    %648 = vmatprep.subr.bf16.mxu0 0
    %649 = vmatpush1.bf16.msra.mxu0 %v486
    %650 = vmatprep.subr.bf16.mxu0 0
    %651 = vmatpush1.bf16.msra.mxu0 %v487
    %652 = vmatprep.subr.bf16.mxu0 0
    %653 = vmatpush1.bf16.msra.mxu0 %v488
    %654 = vmatprep.subr.bf16.mxu0 0
    %655 = vmatpush1.bf16.msra.mxu0 %v489
    %656 = vmatprep.subr.bf16.mxu0 0
    %657 = vmatpush1.bf16.msra.mxu0 %v490
    %658 = vmatprep.subr.bf16.mxu0 0
    %659 = vmatpush1.bf16.msra.mxu0 %v491
    %660 = vmatprep.subr.bf16.mxu0 0
    %661 = vmatpush1.bf16.msra.mxu0 %v492
    %662 = vmatprep.subr.bf16.mxu0 0
    %663 = vmatpush1.bf16.msra.mxu0 %v493
    %664 = vmatprep.subr.bf16.mxu0 0
    %665 = vmatpush1.bf16.msra.mxu0 %v494
    %666 = vmatprep.subr.bf16.mxu0 0
    %667 = vmatpush1.bf16.msra.mxu0 %v495
    %668 = vmatprep.subr.bf16.mxu0 0
    %669 = vmatpush1.bf16.msra.mxu0 %v496
    %670 = vmatprep.subr.bf16.mxu0 0
    %671 = vmatpush1.bf16.msra.mxu0 %v497
    %672 = vmatprep.subr.bf16.mxu0 0
    %673 = vmatpush1.bf16.msra.mxu0 %v498
    %674 = vmatprep.subr.bf16.mxu0 0
    %675 = vmatpush1.bf16.msra.mxu0 %v499
    %676 = vmatprep.subr.bf16.mxu0 0
    %677 = vmatpush1.bf16.msra.mxu0 %v500
    %678 = vmatprep.subr.bf16.mxu0 0
    %679 = vmatpush1.bf16.msra.mxu0 %v501
    %680 = vmatprep.mubr.bf16.mxu0 %v221
    %681 = vmatmul.mubr.bf16.gmra.mrb[0].mxu0 %v220
    %v682 = vpop.f32.mrb[0].mxu0
    %v683 = vadd.f32 %v642, %v682
    %v684 = vpop.f32.mrb[0].mxu0
    %v685 = vpop.f32.mrb[0].mxu0
    %v686 = vadd.f32 %v645, %v685
    %v687 = vpop.f32.mrb[0].mxu0
    %688 = vdwg.mxu0
    %689 = vmatprep.subr.bf16.mxu0 0
    %690 = vmatpush1.bf16.msra.mxu0 %v502
    %691 = vmatprep.subr.bf16.mxu0 0
    %692 = vmatpush1.bf16.msra.mxu0 %v503
    %693 = vmatprep.subr.bf16.mxu0 0
    %694 = vmatpush1.bf16.msra.mxu0 %v504
    %695 = vmatprep.subr.bf16.mxu0 0
    %696 = vmatpush1.bf16.msra.mxu0 %v505
    %697 = vmatprep.subr.bf16.mxu0 0
    %698 = vmatpush1.bf16.msra.mxu0 %v506
    %699 = vmatprep.subr.bf16.mxu0 0
    %700 = vmatpush1.bf16.msra.mxu0 %v507
    %701 = vmatprep.subr.bf16.mxu0 0
    %702 = vmatpush1.bf16.msra.mxu0 %v508
    %703 = vmatprep.subr.bf16.mxu0 0
    %704 = vmatpush1.bf16.msra.mxu0 %v509
    %705 = vmatprep.subr.bf16.mxu0 0
    %706 = vmatpush1.bf16.msra.mxu0 0
    %707 = vmatprep.subr.bf16.mxu0 0
    %708 = vmatpush1.bf16.msra.mxu0 0
    %709 = vmatprep.subr.bf16.mxu0 0
    %710 = vmatpush1.bf16.msra.mxu0 0
    %711 = vmatprep.subr.bf16.mxu0 0
    %712 = vmatpush1.bf16.msra.mxu0 0
    %713 = vmatprep.subr.bf16.mxu0 0
    %714 = vmatpush1.bf16.msra.mxu0 0
    %715 = vmatprep.subr.bf16.mxu0 0
    %716 = vmatpush1.bf16.msra.mxu0 0
    %717 = vmatprep.subr.bf16.mxu0 0
    %718 = vmatpush1.bf16.msra.mxu0 0
    %719 = vmatprep.subr.bf16.mxu0 0
    %720 = vmatpush1.bf16.msra.mxu0 0
    %721 = vmatprep.mubr.bf16.mxu0 0
    %722 = vmatmul.mubr.bf16.gmra.mrb[0].mxu0 %v222
    %v723 = vpop.f32.mrb[0].mxu0
    %v724 = vadd.f32 %v683, %v723
    %v725 = vpop.f32.mrb[0].mxu0
    %v726 = vpop.f32.mrb[0].mxu0
    %v727 = vadd.f32 %v686, %v726
    %v728 = vpop.f32.mrb[0].mxu0
    %729 = vdwg.mxu0
    %v730 = vmax.f32 %v724, 0.0
    %v731 = vmax.f32 %v727, 0.0
    %v732 = vpack.c.bf16 %v731, %v730
    %v733 = vld [vmem:[#allocation7] sm:$0xf]
    %v734 = vld [vmem:[#allocation7 + $0x4] sm:$0xf]
    %v735 = vld [vmem:[#allocation7 + $0x8] sm:$0xf]
    %v736 = vld [vmem:[#allocation7 + $0xc] sm:$0xf]
    %v737 = vld [vmem:[#allocation7 + $0x10] sm:$0xf]
    %v738 = vld [vmem:[#allocation7 + $0x14] sm:$0xf]
    %v739 = vld [vmem:[#allocation7 + $0x18] sm:$0xf]
    %v740 = vld [vmem:[#allocation7 + $0x1c] sm:$0xf]
    %v741 = vld [vmem:[#allocation7 + $0x20] sm:$0xf]
    %v742 = vld [vmem:[#allocation7 + $0x24] sm:$0xf]
    %v743 = vld [vmem:[#allocation7 + $0x28] sm:$0xf]
    %v744 = vld [vmem:[#allocation7 + $0x2c] sm:$0xf]
    %v745 = vld [vmem:[#allocation7 + $0x30] sm:$0xf]
    %v746 = vld [vmem:[#allocation7 + $0x34] sm:$0xf]
    %v747 = vld [vmem:[#allocation7 + $0x38] sm:$0xf]
    %v748 = vld [vmem:[#allocation7 + $0x3c] sm:$0xf]
    %v765 = vunpack.c.l.b16 %v733
    %v766 = vunpack.c.l.b16 %v734
    %v767 = vunpack.c.l.b16 %v735
    %v768 = vunpack.c.l.b16 %v736
    %v769 = vunpack.c.l.b16 %v737
    %v770 = vunpack.c.l.b16 %v738
    %v771 = vunpack.c.l.b16 %v739
    %v772 = vunpack.c.l.b16 %v740
    %v773 = vunpack.c.l.b16 %v741
    %v774 = vunpack.c.l.b16 %v742
    %v775 = vunpack.c.l.b16 %v743
    %v776 = vunpack.c.l.b16 %v744
    %v777 = vunpack.c.l.b16 %v745
    %v778 = vunpack.c.l.b16 %v746
    %v779 = vunpack.c.l.b16 %v747
    %v780 = vunpack.c.l.b16 %v748
    %v781 = vpack.c.b16 %v766, %v765
    %v782 = vpack.c.b16 %v768, %v767
    %v783 = vpack.c.b16 %v770, %v769
    %v784 = vpack.c.b16 %v772, %v771
    %v785 = vpack.c.b16 %v774, %v773
    %v786 = vpack.c.b16 %v776, %v775
    %v787 = vpack.c.b16 %v778, %v777
    %v788 = vpack.c.b16 %v780, %v779
    %797 = vmatprep.subr.bf16.mxu0 0
    %798 = vmatpush1.bf16.msra.mxu0 %v781
    %799 = vmatprep.subr.bf16.mxu0 0
    %800 = vmatpush1.bf16.msra.mxu0 %v782
    %801 = vmatprep.subr.bf16.mxu0 0
    %802 = vmatpush1.bf16.msra.mxu0 %v783
    %803 = vmatprep.subr.bf16.mxu0 0
    %804 = vmatpush1.bf16.msra.mxu0 %v784
    %805 = vmatprep.subr.bf16.mxu0 0
    %806 = vmatpush1.bf16.msra.mxu0 %v785
    %807 = vmatprep.subr.bf16.mxu0 0
    %808 = vmatpush1.bf16.msra.mxu0 %v786
    %809 = vmatprep.subr.bf16.mxu0 0
    %810 = vmatpush1.bf16.msra.mxu0 %v787
    %811 = vmatprep.subr.bf16.mxu0 0
    %812 = vmatpush1.bf16.msra.mxu0 %v788
    %813 = vmatprep.subr.bf16.mxu0 0
    %814 = vmatpush1.bf16.msra.mxu0 0
    %815 = vmatprep.subr.bf16.mxu0 0
    %816 = vmatpush1.bf16.msra.mxu0 0
    %817 = vmatprep.subr.bf16.mxu0 0
    %818 = vmatpush1.bf16.msra.mxu0 0
    %819 = vmatprep.subr.bf16.mxu0 0
    %820 = vmatpush1.bf16.msra.mxu0 0
    %821 = vmatprep.subr.bf16.mxu0 0
    %822 = vmatpush1.bf16.msra.mxu0 0
    %823 = vmatprep.subr.bf16.mxu0 0
    %824 = vmatpush1.bf16.msra.mxu0 0
    %825 = vmatprep.subr.bf16.mxu0 0
    %826 = vmatpush1.bf16.msra.mxu0 0
    %827 = vmatprep.subr.bf16.mxu0 0
    %828 = vmatpush1.bf16.msra.mxu0 0
    %829 = vmatprep.mubr.bf16.mxu0 0
    %830 = vmatmul.mubr.bf16.gmra.mrb[0].mxu0 %v732
    %v831 = vpop.f32.mrb[0].mxu0
    %v832 = vadd.f32 0.0, %v831
    %v833 = vpop.f32.mrb[0].mxu0
    %v834 = vpop.f32.mrb[0].mxu0
    %v835 = vadd.f32 0.0, %v834
    %v836 = vpop.f32.mrb[0].mxu0
    %837 = vdwg.mxu0
    %v838 = vmax.f32 %v832, 0.0
    %v839 = vmax.f32 %v835, 0.0
    %v840 = vpack.c.bf16 %v839, %v838
    %v841 = vld [vmem:[#allocation8] sm:$0xf]
    %v842 = vld [vmem:[#allocation8 + $0x4] sm:$0xf]
    %v843 = vld [vmem:[#allocation8 + $0x8] sm:$0xf]
    %v844 = vld [vmem:[#allocation8 + $0xc] sm:$0xf]
    %v845 = vld [vmem:[#allocation8 + $0x10] sm:$0xf]
    %v846 = vld [vmem:[#allocation8 + $0x14] sm:$0xf]
    %v847 = vld [vmem:[#allocation8 + $0x18] sm:$0xf]
    %v848 = vld [vmem:[#allocation8 + $0x1c] sm:$0xf]
    %v849 = vld [vmem:[#allocation8 + $0x20] sm:$0xf]
    %v850 = vld [vmem:[#allocation8 + $0x24] sm:$0xf]
    %v851 = vld [vmem:[#allocation8 + $0x28] sm:$0xf]
    %v852 = vld [vmem:[#allocation8 + $0x2c] sm:$0xf]
    %v853 = vld [vmem:[#allocation8 + $0x30] sm:$0xf]
    %v854 = vld [vmem:[#allocation8 + $0x34] sm:$0xf]
    %v855 = vld [vmem:[#allocation8 + $0x38] sm:$0xf]
    %v856 = vld [vmem:[#allocation8 + $0x3c] sm:$0xf]
    %v873 = vunpack.c.l.b16 %v841
    %v874 = vunpack.c.l.b16 %v842
    %v875 = vunpack.c.l.b16 %v843
    %v876 = vunpack.c.l.b16 %v844
    %v877 = vunpack.c.l.b16 %v845
    %v878 = vunpack.c.l.b16 %v846
    %v879 = vunpack.c.l.b16 %v847
    %v880 = vunpack.c.l.b16 %v848
    %v881 = vunpack.c.l.b16 %v849
    %v882 = vunpack.c.l.b16 %v850
    %v883 = vunpack.c.l.b16 %v851
    %v884 = vunpack.c.l.b16 %v852
    %v885 = vunpack.c.l.b16 %v853
    %v886 = vunpack.c.l.b16 %v854
    %v887 = vunpack.c.l.b16 %v855
    %v888 = vunpack.c.l.b16 %v856
    %v889 = vpack.c.b16 %v874, %v873
    %v890 = vpack.c.b16 %v876, %v875
    %v891 = vpack.c.b16 %v878, %v877
    %v892 = vpack.c.b16 %v880, %v879
    %v893 = vpack.c.b16 %v882, %v881
    %v894 = vpack.c.b16 %v884, %v883
    %v895 = vpack.c.b16 %v886, %v885
    %v896 = vpack.c.b16 %v888, %v887
    %905 = vmatprep.subr.bf16.mxu0 0
    %906 = vmatpush1.bf16.msra.mxu0 %v889
    %907 = vmatprep.subr.bf16.mxu0 0
    %908 = vmatpush1.bf16.msra.mxu0 %v890
    %909 = vmatprep.subr.bf16.mxu0 0
    %910 = vmatpush1.bf16.msra.mxu0 %v891
    %911 = vmatprep.subr.bf16.mxu0 0
    %912 = vmatpush1.bf16.msra.mxu0 %v892
    %913 = vmatprep.subr.bf16.mxu0 0
    %914 = vmatpush1.bf16.msra.mxu0 %v893
    %915 = vmatprep.subr.bf16.mxu0 0
    %916 = vmatpush1.bf16.msra.mxu0 %v894
    %917 = vmatprep.subr.bf16.mxu0 0
    %918 = vmatpush1.bf16.msra.mxu0 %v895
    %919 = vmatprep.subr.bf16.mxu0 0
    %920 = vmatpush1.bf16.msra.mxu0 %v896
    %921 = vmatprep.subr.bf16.mxu0 0
    %922 = vmatpush1.bf16.msra.mxu0 0
    %923 = vmatprep.subr.bf16.mxu0 0
    %924 = vmatpush1.bf16.msra.mxu0 0
    %925 = vmatprep.subr.bf16.mxu0 0
    %926 = vmatpush1.bf16.msra.mxu0 0
    %927 = vmatprep.subr.bf16.mxu0 0
    %928 = vmatpush1.bf16.msra.mxu0 0
    %929 = vmatprep.subr.bf16.mxu0 0
    %930 = vmatpush1.bf16.msra.mxu0 0
    %931 = vmatprep.subr.bf16.mxu0 0
    %932 = vmatpush1.bf16.msra.mxu0 0
    %933 = vmatprep.subr.bf16.mxu0 0
    %934 = vmatpush1.bf16.msra.mxu0 0
    %935 = vmatprep.subr.bf16.mxu0 0
    %936 = vmatpush1.bf16.msra.mxu0 0
    %937 = vmatprep.mubr.bf16.mxu0 0
    %938 = vmatmul.mubr.bf16.gmra.mrb[0].mxu0 %v840
    %v939 = vpop.f32.mrb[0].mxu0
    %v940 = vadd.f32 0.0, %v939
    %v941 = vpop.f32.mrb[0].mxu0
    %v942 = vpop.f32.mrb[0].mxu0
    %v943 = vadd.f32 0.0, %v942
    %v944 = vpop.f32.mrb[0].mxu0
    %945 = vdwg.mxu0
    %946 = vst [vmem:[#allocation10] sm:$0xff] %v940
    %947 = vst [vmem:[#allocation10 + $0x8] sm:$0xff] %v943
    // Predicated region
    $region34: #{tpu_custom_call.1} parent=1 // pred_check
      _
    $region35: #{tpu_custom_call.1} parent=1 // pred_check_branch
      %949 = sbr.rel (0) target = $region37
    $region36: #{tpu_custom_call.1} parent=1 // pred_region
      %s951 = ssub.s32 256, 256
      %952 = vsyncadd [#allocation4], %s951
      %s953 = sshll.u32 [#allocation10], 4
      %s954 = int_to_ptr.vmem [resolvable:$true] %s953
      %959 = dma.vmem_to_hbm [thread:$0]  %s954, 256, %s4, [#allocation4], 128, 128, 8
    $region37: #{tpu_custom_call.1} parent=1 // pred_fallthru
      _
    // Predicated region
    $region38: #{tpu_custom_call.1} parent=1 // pred_check
      _
    $region39: #{tpu_custom_call.1} parent=1 // pred_check_branch
      %961 = sbr.rel (0) target = $region41
    $region40: #{tpu_custom_call.1} parent=1 // pred_region
      %962 = dma.done [#allocation4], 256
    $region41: #{tpu_custom_call.1} parent=1 // pred_fallthru
      _
    %963 = vsyncpa [#allocation3], 1
    %964 = vsyncpa [#allocation6], 1
    %965 = vsyncpa [#allocation9], 1
    %966 = vsyncpa [#allocation4], 1

</llo_original>
